<compile_context>
chip_gen: v7x
topology: tpu7x:2x2x1
jax: 0.10.0
libtpu: 0.0.40
codegen_flags: <defaults>
</compile_context>

<pallas_src>
import jax
import jax.numpy as jnp
from jax.experimental import pallas as pl
from jax.experimental.pallas import tpu as pltpu

# ----- problem sizes (small, consistent with an SSD-style head) -------------
N, C, H, W = 2, 4, 16, 16          # batch, channels, spatial (NCHW)
D = C * H * W                      # 1024 flattened features
P = 8                              # number of priors
NUM_CLASSES = 16                   # classes per prior
LOC_DIM = P * 4                    # 32
SCO_DIM = P * NUM_CLASSES          # 128  (lane-dense score output)


def _ts_head_kernel(x_ref, wl_ref, ws_ref, loc_ref, sco_ref):
    """Fused synthetic detection head + (pre-folded) temperature scaling.

    x_ref   : VMEM (N, D)        bf16 -- flattened NCHW input
    wl_ref  : VMEM (D, LOC_DIM)  bf16 -- loc projection weights
    ws_ref  : VMEM (D, SCO_DIM)  bf16 -- score projection weights * (1/T)
    loc_ref : VMEM (N, LOC_DIM)  f32  -- predicted_locs (flat)
    sco_ref : VMEM (N, SCO_DIM)  f32  -- predicted_scores / temperature (flat)
    """
    x = x_ref[...]
    # Two MXU passes, f32 accumulation.  1/T is already folded into ws_ref at
    # prep time, so no per-element VPU scaling is needed here.
    loc_ref[...] = jnp.dot(x, wl_ref[...], preferred_element_type=jnp.float32)
    sco_ref[...] = jnp.dot(x, ws_ref[...], preferred_element_type=jnp.float32)


def prepare_head(w_loc, w_score, temperature):
    """One-time (calibration-time) weight prep.

    Casts weights to bf16 (halves the dominant weight DMA) and folds
    1/temperature into the score columns so the per-call kernel is a pure
    matmul.  This runs once, NOT inside the traced forward.
    """
    temperature = float(temperature)
    if temperature == 0.0:
        # PyTorch __init__ default is temperature = 0 (uncalibrated) -> would
        # divide by zero in forward.  Reject it here instead of emitting nan.
        raise ValueError("temperature must be calibrated (non-zero) before forward()")
    w_loc_b = jnp.asarray(w_loc, jnp.float32).astype(jnp.bfloat16)
    w_score_b = (jnp.asarray(w_score, jnp.float32) / temperature).astype(jnp.bfloat16)
    return w_loc_b, w_score_b


def temperature_scaling_forward(x_nchw, w_loc_b, w_score_scaled_b):
    """JAX wrapper mirroring TemperatureScaling.forward.

    Takes the pre-prepared bf16 weights from `prepare_head` (1/T already
    folded into the score weights).  Works for any batch size N; for best MXU
    utilization stack >=128 rows per invocation.
    """
    n = x_nchw.shape[0]
    x_flat = x_nchw.reshape(n, -1).astype(jnp.bfloat16)

    cost = pl.CostEstimate(
        flops=2 * n * D * (LOC_DIM + SCO_DIM),
        transcendentals=0,
        bytes_accessed=(n * D * 2                      # x (bf16)
                        + D * (LOC_DIM + SCO_DIM) * 2  # weights (bf16)
                        + n * (LOC_DIM + SCO_DIM) * 4  # outputs (f32)
                        ),
    )

    locs_flat, scores_flat = pl.pallas_call(
        _ts_head_kernel,
        out_shape=(
            jax.ShapeDtypeStruct((n, LOC_DIM), jnp.float32),
            jax.ShapeDtypeStruct((n, SCO_DIM), jnp.float32),
        ),
        in_specs=[
            pl.BlockSpec(memory_space=pltpu.MemorySpace.VMEM),   # x_flat
            pl.BlockSpec(memory_space=pltpu.MemorySpace.VMEM),   # w_loc (bf16)
            pl.BlockSpec(memory_space=pltpu.MemorySpace.VMEM),   # w_score * 1/T (bf16)
        ],
        out_specs=(
            pl.BlockSpec(memory_space=pltpu.MemorySpace.VMEM),   # locs
            pl.BlockSpec(memory_space=pltpu.MemorySpace.VMEM),   # scores (lane-dense 128)
        ),
        cost_estimate=cost,
    )(x_flat, w_loc_b, w_score_scaled_b)

    predicted_locs = locs_flat.reshape(n, P, 4)
    predicted_scores = scores_flat.reshape(n, P, NUM_CLASSES)
    return predicted_locs, predicted_scores


if __name__ == "__main__":
    key = jax.random.PRNGKey(0)
    k_x, k_wl, k_ws = jax.random.split(key, 3)

    # Deterministic example input (NCHW) and synthetic model parameters.
    x = jax.random.normal(k_x, (N, C, H, W), dtype=jnp.float32)
    w_loc = jax.random.normal(k_wl, (D, LOC_DIM), dtype=jnp.float32) * 0.02
    w_score = jax.random.normal(k_ws, (D, SCO_DIM), dtype=jnp.float32) * 0.02

    temperature = 1.5  # calibrated value (PyTorch default 0 is rejected in prep)

    # One-time weight preparation (bf16 cast + 1/T fold), outside the forward.
    w_loc_b, w_score_scaled_b = prepare_head(w_loc, w_score, temperature)

    fwd = jax.jit(temperature_scaling_forward)
    locs, scores = fwd(x, w_loc_b, w_score_scaled_b)
    jax.block_until_ready((locs, scores))

    # --- correctness checks --------------------------------------------------
    x_b = x.reshape(N, -1).astype(jnp.bfloat16)

    # (1) Kernel vs pure-JAX dot on the *same* prepared bf16 weights
    #     (validates the Pallas matmul + stores; both use f32 accumulation).
    ref_locs = jnp.dot(x_b, w_loc_b, preferred_element_type=jnp.float32)
    ref_scores = jnp.dot(x_b, w_score_scaled_b, preferred_element_type=jnp.float32)
    assert jnp.allclose(locs.reshape(N, -1), ref_locs, atol=1e-4, rtol=1e-4)
    assert jnp.allclose(scores.reshape(N, -1), ref_scores, atol=1e-4, rtol=1e-4)

    # (2) Semantic check vs the module definition (scores = head(x) / T) in
    #     full f32; generous tolerance covers the bf16 input/weight cast.
    ref2_scores = (jnp.dot(x.reshape(N, -1), w_score) / temperature)
    assert jnp.allclose(scores.reshape(N, -1), ref2_scores, atol=2e-2, rtol=2e-2)

    print("KERNEL_OK")
</pallas_src>

<mosaic_0001>
module attributes {stable_mosaic.version = 11 : i64} {
  func.func @_ts_head_kernel(%arg0: memref<2x1024xbf16, #tpu.memory_space<vmem>>, %arg1: memref<1024x32xbf16, #tpu.memory_space<vmem>>, %arg2: memref<1024x128xbf16, #tpu.memory_space<vmem>>, %arg3: memref<2x32xf32, #tpu.memory_space<vmem>>, %arg4: memref<2x128xf32, #tpu.memory_space<vmem>>) attributes {dimension_semantics = [], scalar_prefetch = 0 : i64, scratch_operands = 0 : i64, tpu.core_type = #tpu.core_type<tc>} {
    %c0 = arith.constant 0 : index
    %c0_0 = arith.constant 0 : index
    %0 = vector.load %arg0[%c0, %c0_0] : memref<2x1024xbf16, #tpu.memory_space<vmem>>, vector<2x1024xbf16>
    %c0_1 = arith.constant 0 : index
    %c0_2 = arith.constant 0 : index
    %1 = vector.load %arg1[%c0_1, %c0_2] : memref<1024x32xbf16, #tpu.memory_space<vmem>>, vector<1024x32xbf16>
    %cst = arith.constant dense<0.000000e+00> : vector<2x32xf32>
    %2 = tpu.matmul %0, %1, %cst {dimension_numbers = #tpu.dot_dimension_numbers<[1], [0], [0], [1], [0, 0, 1, 1], [], []>} : vector<2x1024xbf16>, vector<1024x32xbf16>, vector<2x32xf32> -> vector<2x32xf32>
    %c0_3 = arith.constant 0 : index
    %c0_4 = arith.constant 0 : index
    %3 = vector.load %arg3[%c0_3, %c0_4] : memref<2x32xf32, #tpu.memory_space<vmem>>, vector<2x32xf32>
    tpu.vector_store %arg3[%c0_3, %c0_4], %2 {strides = array<i32>} : memref<2x32xf32, #tpu.memory_space<vmem>>, vector<2x32xf32>,
    %c0_5 = arith.constant 0 : index
    %c0_6 = arith.constant 0 : index
    %4 = vector.load %arg2[%c0_5, %c0_6] : memref<1024x128xbf16, #tpu.memory_space<vmem>>, vector<1024x128xbf16>
    %cst_7 = arith.constant dense<0.000000e+00> : vector<2x128xf32>
    %5 = tpu.matmul %0, %4, %cst_7 {dimension_numbers = #tpu.dot_dimension_numbers<[1], [0], [0], [1], [0, 0, 1, 1], [], []>} : vector<2x1024xbf16>, vector<1024x128xbf16>, vector<2x128xf32> -> vector<2x128xf32>
    %c0_8 = arith.constant 0 : index
    %c0_9 = arith.constant 0 : index
    %6 = vector.load %arg4[%c0_8, %c0_9] : memref<2x128xf32, #tpu.memory_space<vmem>>, vector<2x128xf32>
    tpu.vector_store %arg4[%c0_8, %c0_9], %5 {strides = array<i32>} : memref<2x128xf32, #tpu.memory_space<vmem>>, vector<2x128xf32>,
    return
  }
}

</mosaic_0001>

<llo_original>
// kernel: temperature_scaling_forward.1
$region0: #{temperature_scaling_forward.1}
  #allocation0 [shape = 'u32[]', space=smem, size = 0x4, offset = 0x4, fixed_abs, tag = 'smem constant byte address 0x4 - core index']
  #allocation1 [shape = 'u32[144,128]{1,0:T(1,128)}', space=vmem, size = 0x12000, scoped, tag = 'internal scratch']
  %s0 = inlined_call_operand.vmem [shape: bf16[2,1024], index: 0, kind: input, shape index: {}]
  %s1 = inlined_call_operand.vmem [shape: bf16[1024,32], index: 1, kind: input, shape index: {}]
  %s2 = inlined_call_operand.vmem [shape: bf16[1024,128], index: 2, kind: input, shape index: {}]
  %s3 = inlined_call_operand.vmem [shape: f32[2,32], index: 3, kind: output, shape index: {0}]
  %s4 = inlined_call_operand.vmem [shape: f32[2,128], index: 4, kind: output, shape index: {1}]
  %5 = xla_tuple %s3, %s4
  %s6 = sld [smem:[#allocation0]]
  $region30: #{temperature_scaling_forward.1} parent=0
    _
  %s8 = ssub.s32 1, %s6
  %s9 = scalar_select 0, %s8, %s6
  // Predicated region
  $region2: #{temperature_scaling_forward.1} parent=0 // pred_check
    _
  $region3: #{temperature_scaling_forward.1} parent=0 // pred_check_branch
    %11 = sbr.rel (0) target = $region5
  $region4: #{temperature_scaling_forward.1} parent=0 // pred_region
    _
  $region5: #{temperature_scaling_forward.1} parent=0 // pred_fallthru
    _
  // Predicated region
  $region6: #{temperature_scaling_forward.1} parent=0 // pred_check
    _
  $region7: #{temperature_scaling_forward.1} parent=0 // pred_check_branch
    %13 = sbr.rel (0) target = $region9
  $region8: #{temperature_scaling_forward.1} parent=0 // pred_region
    _
  $region9: #{temperature_scaling_forward.1} parent=0 // pred_fallthru
    _
  // Predicated region
  $region10: #{temperature_scaling_forward.1} parent=0 // pred_check
    _
  $region11: #{temperature_scaling_forward.1} parent=0 // pred_check_branch
    %15 = sbr.rel (0) target = $region13
  $region12: #{temperature_scaling_forward.1} parent=0 // pred_region
    _
  $region13: #{temperature_scaling_forward.1} parent=0 // pred_fallthru
    _
  %v17 = vld [vmem:[%s0] sm:$0xff]
  %v18 = vld [vmem:[%s1] sm:$0xf]
  %v19 = vld [vmem:[%s1 + $0x4] sm:$0xf]
  %v20 = vld [vmem:[%s1 + $0x8] sm:$0xf]
  %v21 = vld [vmem:[%s1 + $0xc] sm:$0xf]
  %v22 = vld [vmem:[%s1 + $0x10] sm:$0xf]
  %v23 = vld [vmem:[%s1 + $0x14] sm:$0xf]
  %v24 = vld [vmem:[%s1 + $0x18] sm:$0xf]
  %v25 = vld [vmem:[%s1 + $0x1c] sm:$0xf]
  %v26 = vld [vmem:[%s1 + $0x20] sm:$0xf]
  %v27 = vld [vmem:[%s1 + $0x24] sm:$0xf]
  %v28 = vld [vmem:[%s1 + $0x28] sm:$0xf]
  %v29 = vld [vmem:[%s1 + $0x2c] sm:$0xf]
  %v30 = vld [vmem:[%s1 + $0x30] sm:$0xf]
  %v31 = vld [vmem:[%s1 + $0x34] sm:$0xf]
  %v32 = vld [vmem:[%s1 + $0x38] sm:$0xf]
  %v33 = vld [vmem:[%s1 + $0x3c] sm:$0xf]
  %v34 = vld [vmem:[%s1 + $0x40] sm:$0xf]
  %v35 = vld [vmem:[%s1 + $0x44] sm:$0xf]
  %v36 = vld [vmem:[%s1 + $0x48] sm:$0xf]
  %v37 = vld [vmem:[%s1 + $0x4c] sm:$0xf]
  %v38 = vld [vmem:[%s1 + $0x50] sm:$0xf]
  %v39 = vld [vmem:[%s1 + $0x54] sm:$0xf]
  %v40 = vld [vmem:[%s1 + $0x58] sm:$0xf]
  %v41 = vld [vmem:[%s1 + $0x5c] sm:$0xf]
  %v42 = vld [vmem:[%s1 + $0x60] sm:$0xf]
  %v43 = vld [vmem:[%s1 + $0x64] sm:$0xf]
  %v44 = vld [vmem:[%s1 + $0x68] sm:$0xf]
  %v45 = vld [vmem:[%s1 + $0x6c] sm:$0xf]
  %v46 = vld [vmem:[%s1 + $0x70] sm:$0xf]
  %v47 = vld [vmem:[%s1 + $0x74] sm:$0xf]
  %v48 = vld [vmem:[%s1 + $0x78] sm:$0xf]
  %v49 = vld [vmem:[%s1 + $0x7c] sm:$0xf]
  %v50 = vld [vmem:[%s1 + $0x80] sm:$0xf]
  %v51 = vld [vmem:[%s1 + $0x84] sm:$0xf]
  %v52 = vld [vmem:[%s1 + $0x88] sm:$0xf]
  %v53 = vld [vmem:[%s1 + $0x8c] sm:$0xf]
  %v54 = vld [vmem:[%s1 + $0x90] sm:$0xf]
  %v55 = vld [vmem:[%s1 + $0x94] sm:$0xf]
  %v56 = vld [vmem:[%s1 + $0x98] sm:$0xf]
  %v57 = vld [vmem:[%s1 + $0x9c] sm:$0xf]
  %v58 = vld [vmem:[%s1 + $0xa0] sm:$0xf]
  %v59 = vld [vmem:[%s1 + $0xa4] sm:$0xf]
  %v60 = vld [vmem:[%s1 + $0xa8] sm:$0xf]
  %v61 = vld [vmem:[%s1 + $0xac] sm:$0xf]
  %v62 = vld [vmem:[%s1 + $0xb0] sm:$0xf]
  %v63 = vld [vmem:[%s1 + $0xb4] sm:$0xf]
  %v64 = vld [vmem:[%s1 + $0xb8] sm:$0xf]
  %v65 = vld [vmem:[%s1 + $0xbc] sm:$0xf]
  %v66 = vld [vmem:[%s1 + $0xc0] sm:$0xf]
  %v67 = vld [vmem:[%s1 + $0xc4] sm:$0xf]
  %v68 = vld [vmem:[%s1 + $0xc8] sm:$0xf]
  %v69 = vld [vmem:[%s1 + $0xcc] sm:$0xf]
  %v70 = vld [vmem:[%s1 + $0xd0] sm:$0xf]
  %v71 = vld [vmem:[%s1 + $0xd4] sm:$0xf]
  %v72 = vld [vmem:[%s1 + $0xd8] sm:$0xf]
  %v73 = vld [vmem:[%s1 + $0xdc] sm:$0xf]
  %v74 = vld [vmem:[%s1 + $0xe0] sm:$0xf]
  %v75 = vld [vmem:[%s1 + $0xe4] sm:$0xf]
  %v76 = vld [vmem:[%s1 + $0xe8] sm:$0xf]
  %v77 = vld [vmem:[%s1 + $0xec] sm:$0xf]
  %v78 = vld [vmem:[%s1 + $0xf0] sm:$0xf]
  %v79 = vld [vmem:[%s1 + $0xf4] sm:$0xf]
  %v80 = vld [vmem:[%s1 + $0xf8] sm:$0xf]
  %v81 = vld [vmem:[%s1 + $0xfc] sm:$0xf]
  %v82 = vld [vmem:[%s1 + $0x100] sm:$0xf]
  %v83 = vld [vmem:[%s1 + $0x104] sm:$0xf]
  %v84 = vld [vmem:[%s1 + $0x108] sm:$0xf]
  %v85 = vld [vmem:[%s1 + $0x10c] sm:$0xf]
  %v86 = vld [vmem:[%s1 + $0x110] sm:$0xf]
  %v87 = vld [vmem:[%s1 + $0x114] sm:$0xf]
  %v88 = vld [vmem:[%s1 + $0x118] sm:$0xf]
  %v89 = vld [vmem:[%s1 + $0x11c] sm:$0xf]
  %v90 = vld [vmem:[%s1 + $0x120] sm:$0xf]
  %v91 = vld [vmem:[%s1 + $0x124] sm:$0xf]
  %v92 = vld [vmem:[%s1 + $0x128] sm:$0xf]
  %v93 = vld [vmem:[%s1 + $0x12c] sm:$0xf]
  %v94 = vld [vmem:[%s1 + $0x130] sm:$0xf]
  %v95 = vld [vmem:[%s1 + $0x134] sm:$0xf]
  %v96 = vld [vmem:[%s1 + $0x138] sm:$0xf]
  %v97 = vld [vmem:[%s1 + $0x13c] sm:$0xf]
  %v98 = vld [vmem:[%s1 + $0x140] sm:$0xf]
  %v99 = vld [vmem:[%s1 + $0x144] sm:$0xf]
  %v100 = vld [vmem:[%s1 + $0x148] sm:$0xf]
  %v101 = vld [vmem:[%s1 + $0x14c] sm:$0xf]
  %v102 = vld [vmem:[%s1 + $0x150] sm:$0xf]
  %v103 = vld [vmem:[%s1 + $0x154] sm:$0xf]
  %v104 = vld [vmem:[%s1 + $0x158] sm:$0xf]
  %v105 = vld [vmem:[%s1 + $0x15c] sm:$0xf]
  %v106 = vld [vmem:[%s1 + $0x160] sm:$0xf]
  %v107 = vld [vmem:[%s1 + $0x164] sm:$0xf]
  %v108 = vld [vmem:[%s1 + $0x168] sm:$0xf]
  %v109 = vld [vmem:[%s1 + $0x16c] sm:$0xf]
  %v110 = vld [vmem:[%s1 + $0x170] sm:$0xf]
  %v111 = vld [vmem:[%s1 + $0x174] sm:$0xf]
  %v112 = vld [vmem:[%s1 + $0x178] sm:$0xf]
  %v113 = vld [vmem:[%s1 + $0x17c] sm:$0xf]
  %v114 = vld [vmem:[%s1 + $0x180] sm:$0xf]
  %v115 = vld [vmem:[%s1 + $0x184] sm:$0xf]
  %v116 = vld [vmem:[%s1 + $0x188] sm:$0xf]
  %v117 = vld [vmem:[%s1 + $0x18c] sm:$0xf]
  %v118 = vld [vmem:[%s1 + $0x190] sm:$0xf]
  %v119 = vld [vmem:[%s1 + $0x194] sm:$0xf]
  %v120 = vld [vmem:[%s1 + $0x198] sm:$0xf]
  %v121 = vld [vmem:[%s1 + $0x19c] sm:$0xf]
  %v122 = vld [vmem:[%s1 + $0x1a0] sm:$0xf]
  %v123 = vld [vmem:[%s1 + $0x1a4] sm:$0xf]
  %v124 = vld [vmem:[%s1 + $0x1a8] sm:$0xf]
  %v125 = vld [vmem:[%s1 + $0x1ac] sm:$0xf]
  %v126 = vld [vmem:[%s1 + $0x1b0] sm:$0xf]
  %v127 = vld [vmem:[%s1 + $0x1b4] sm:$0xf]
  %v128 = vld [vmem:[%s1 + $0x1b8] sm:$0xf]
  %v129 = vld [vmem:[%s1 + $0x1bc] sm:$0xf]
  %v130 = vld [vmem:[%s1 + $0x1c0] sm:$0xf]
  %v131 = vld [vmem:[%s1 + $0x1c4] sm:$0xf]
  %v132 = vld [vmem:[%s1 + $0x1c8] sm:$0xf]
  %v133 = vld [vmem:[%s1 + $0x1cc] sm:$0xf]
  %v134 = vld [vmem:[%s1 + $0x1d0] sm:$0xf]
  %v135 = vld [vmem:[%s1 + $0x1d4] sm:$0xf]
  %v136 = vld [vmem:[%s1 + $0x1d8] sm:$0xf]
  %v137 = vld [vmem:[%s1 + $0x1dc] sm:$0xf]
  %v138 = vld [vmem:[%s1 + $0x1e0] sm:$0xf]
  %v139 = vld [vmem:[%s1 + $0x1e4] sm:$0xf]
  %v140 = vld [vmem:[%s1 + $0x1e8] sm:$0xf]
  %v141 = vld [vmem:[%s1 + $0x1ec] sm:$0xf]
  %v142 = vld [vmem:[%s1 + $0x1f0] sm:$0xf]
  %v143 = vld [vmem:[%s1 + $0x1f4] sm:$0xf]
  %v144 = vld [vmem:[%s1 + $0x1f8] sm:$0xf]
  %v145 = vld [vmem:[%s1 + $0x1fc] sm:$0xf]
  %v147 = vcombine.high %v17, %v17
  %v149 = vunpack.c.l.s4 1966171168
  %v150 = vunpack.c.0.s8 %v149
  %v151 = vlaneseq
  %v152 = vshrl.u32 %v151, 7
  %v153 = vsub.s32 %v150, %v152
  %v154 = vrot.slane %v17, %v153
  %v156 = vunpack.c.l.s4 1966171168
  %v157 = vunpack.c.0.s8 %v156
  %v158 = vlaneseq
  %v159 = vshrl.u32 %v158, 7
  %v160 = vsub.s32 %v157, %v159
  %v161 = vrot.slane %v147, %v160
  %v162 = vcombine.high %v154, %v154
  %v163 = vcombine.high %v161, %v161
  %v165 = vunpack.c.l.s4 1966171168
  %v166 = vunpack.c.0.s8 %v165
  %v167 = vlaneseq
  %v168 = vshrl.u32 %v167, 7
  %v169 = vsub.s32 %v166, %v168
  %v170 = vrot.slane %v154, %v169
  %v172 = vunpack.c.l.s4 1966171168
  %v173 = vunpack.c.0.s8 %v172
  %v174 = vlaneseq
  %v175 = vshrl.u32 %v174, 7
  %v176 = vsub.s32 %v173, %v175
  %v177 = vrot.slane %v161, %v176
  %v179 = vunpack.c.l.s4 1966171168
  %v180 = vunpack.c.0.s8 %v179
  %v181 = vlaneseq
  %v182 = vshrl.u32 %v181, 7
  %v183 = vsub.s32 %v180, %v182
  %v184 = vrot.slane %v162, %v183
  %v186 = vunpack.c.l.s4 1966171168
  %v187 = vunpack.c.0.s8 %v186
  %v188 = vlaneseq
  %v189 = vshrl.u32 %v188, 7
  %v190 = vsub.s32 %v187, %v189
  %v191 = vrot.slane %v163, %v190
  %v192 = vcombine.high %v170, %v170
  %v193 = vcombine.high %v177, %v177
  %v194 = vcombine.high %v184, %v184
  %v195 = vcombine.high %v191, %v191
  %v332 = vunpack.c.l.b16 %v18
  %v333 = vunpack.c.l.b16 %v19
  %v334 = vunpack.c.l.b16 %v20
  %v335 = vunpack.c.l.b16 %v21
  %v336 = vunpack.c.l.b16 %v22
  %v337 = vunpack.c.l.b16 %v23
  %v338 = vunpack.c.l.b16 %v24
  %v339 = vunpack.c.l.b16 %v25
  %v340 = vunpack.c.l.b16 %v26
  %v341 = vunpack.c.l.b16 %v27
  %v342 = vunpack.c.l.b16 %v28
  %v343 = vunpack.c.l.b16 %v29
  %v344 = vunpack.c.l.b16 %v30
  %v345 = vunpack.c.l.b16 %v31
  %v346 = vunpack.c.l.b16 %v32
  %v347 = vunpack.c.l.b16 %v33
  %v348 = vunpack.c.l.b16 %v34
  %v349 = vunpack.c.l.b16 %v35
  %v350 = vunpack.c.l.b16 %v36
  %v351 = vunpack.c.l.b16 %v37
  %v352 = vunpack.c.l.b16 %v38
  %v353 = vunpack.c.l.b16 %v39
  %v354 = vunpack.c.l.b16 %v40
  %v355 = vunpack.c.l.b16 %v41
  %v356 = vunpack.c.l.b16 %v42
  %v357 = vunpack.c.l.b16 %v43
  %v358 = vunpack.c.l.b16 %v44
  %v359 = vunpack.c.l.b16 %v45
  %v360 = vunpack.c.l.b16 %v46
  %v361 = vunpack.c.l.b16 %v47
  %v362 = vunpack.c.l.b16 %v48
  %v363 = vunpack.c.l.b16 %v49
  %v364 = vunpack.c.l.b16 %v50
  %v365 = vunpack.c.l.b16 %v51
  %v366 = vunpack.c.l.b16 %v52
  %v367 = vunpack.c.l.b16 %v53
  %v368 = vunpack.c.l.b16 %v54
  %v369 = vunpack.c.l.b16 %v55
  %v370 = vunpack.c.l.b16 %v56
  %v371 = vunpack.c.l.b16 %v57
  %v372 = vunpack.c.l.b16 %v58
  %v373 = vunpack.c.l.b16 %v59
  %v374 = vunpack.c.l.b16 %v60
  %v375 = vunpack.c.l.b16 %v61
  %v376 = vunpack.c.l.b16 %v62
  %v377 = vunpack.c.l.b16 %v63
  %v378 = vunpack.c.l.b16 %v64
  %v379 = vunpack.c.l.b16 %v65
  %v380 = vunpack.c.l.b16 %v66
  %v381 = vunpack.c.l.b16 %v67
  %v382 = vunpack.c.l.b16 %v68
  %v383 = vunpack.c.l.b16 %v69
  %v384 = vunpack.c.l.b16 %v70
  %v385 = vunpack.c.l.b16 %v71
  %v386 = vunpack.c.l.b16 %v72
  %v387 = vunpack.c.l.b16 %v73
  %v388 = vunpack.c.l.b16 %v74
  %v389 = vunpack.c.l.b16 %v75
  %v390 = vunpack.c.l.b16 %v76
  %v391 = vunpack.c.l.b16 %v77
  %v392 = vunpack.c.l.b16 %v78
  %v393 = vunpack.c.l.b16 %v79
  %v394 = vunpack.c.l.b16 %v80
  %v395 = vunpack.c.l.b16 %v81
  %v396 = vunpack.c.l.b16 %v82
  %v397 = vunpack.c.l.b16 %v83
  %v398 = vunpack.c.l.b16 %v84
  %v399 = vunpack.c.l.b16 %v85
  %v400 = vunpack.c.l.b16 %v86
  %v401 = vunpack.c.l.b16 %v87
  %v402 = vunpack.c.l.b16 %v88
  %v403 = vunpack.c.l.b16 %v89
  %v404 = vunpack.c.l.b16 %v90
  %v405 = vunpack.c.l.b16 %v91
  %v406 = vunpack.c.l.b16 %v92
  %v407 = vunpack.c.l.b16 %v93
  %v408 = vunpack.c.l.b16 %v94
  %v409 = vunpack.c.l.b16 %v95
  %v410 = vunpack.c.l.b16 %v96
  %v411 = vunpack.c.l.b16 %v97
  %v412 = vunpack.c.l.b16 %v98
  %v413 = vunpack.c.l.b16 %v99
  %v414 = vunpack.c.l.b16 %v100
  %v415 = vunpack.c.l.b16 %v101
  %v416 = vunpack.c.l.b16 %v102
  %v417 = vunpack.c.l.b16 %v103
  %v418 = vunpack.c.l.b16 %v104
  %v419 = vunpack.c.l.b16 %v105
  %v420 = vunpack.c.l.b16 %v106
  %v421 = vunpack.c.l.b16 %v107
  %v422 = vunpack.c.l.b16 %v108
  %v423 = vunpack.c.l.b16 %v109
  %v424 = vunpack.c.l.b16 %v110
  %v425 = vunpack.c.l.b16 %v111
  %v426 = vunpack.c.l.b16 %v112
  %v427 = vunpack.c.l.b16 %v113
  %v428 = vunpack.c.l.b16 %v114
  %v429 = vunpack.c.l.b16 %v115
  %v430 = vunpack.c.l.b16 %v116
  %v431 = vunpack.c.l.b16 %v117
  %v432 = vunpack.c.l.b16 %v118
  %v433 = vunpack.c.l.b16 %v119
  %v434 = vunpack.c.l.b16 %v120
  %v435 = vunpack.c.l.b16 %v121
  %v436 = vunpack.c.l.b16 %v122
  %v437 = vunpack.c.l.b16 %v123
  %v438 = vunpack.c.l.b16 %v124
  %v439 = vunpack.c.l.b16 %v125
  %v440 = vunpack.c.l.b16 %v126
  %v441 = vunpack.c.l.b16 %v127
  %v442 = vunpack.c.l.b16 %v128
  %v443 = vunpack.c.l.b16 %v129
  %v444 = vunpack.c.l.b16 %v130
  %v445 = vunpack.c.l.b16 %v131
  %v446 = vunpack.c.l.b16 %v132
  %v447 = vunpack.c.l.b16 %v133
  %v448 = vunpack.c.l.b16 %v134
  %v449 = vunpack.c.l.b16 %v135
  %v450 = vunpack.c.l.b16 %v136
  %v451 = vunpack.c.l.b16 %v137
  %v452 = vunpack.c.l.b16 %v138
  %v453 = vunpack.c.l.b16 %v139
  %v454 = vunpack.c.l.b16 %v140
  %v455 = vunpack.c.l.b16 %v141
  %v456 = vunpack.c.l.b16 %v142
  %v457 = vunpack.c.l.b16 %v143
  %v458 = vunpack.c.l.b16 %v144
  %v459 = vunpack.c.l.b16 %v145
  %v460 = vpack.c.b16 %v333, %v332
  %v461 = vpack.c.b16 %v335, %v334
  %v462 = vpack.c.b16 %v337, %v336
  %v463 = vpack.c.b16 %v339, %v338
  %v464 = vpack.c.b16 %v341, %v340
  %v465 = vpack.c.b16 %v343, %v342
  %v466 = vpack.c.b16 %v345, %v344
  %v467 = vpack.c.b16 %v347, %v346
  %v468 = vpack.c.b16 %v349, %v348
  %v469 = vpack.c.b16 %v351, %v350
  %v470 = vpack.c.b16 %v353, %v352
  %v471 = vpack.c.b16 %v355, %v354
  %v472 = vpack.c.b16 %v357, %v356
  %v473 = vpack.c.b16 %v359, %v358
  %v474 = vpack.c.b16 %v361, %v360
  %v475 = vpack.c.b16 %v363, %v362
  %v476 = vpack.c.b16 %v365, %v364
  %v477 = vpack.c.b16 %v367, %v366
  %v478 = vpack.c.b16 %v369, %v368
  %v479 = vpack.c.b16 %v371, %v370
  %v480 = vpack.c.b16 %v373, %v372
  %v481 = vpack.c.b16 %v375, %v374
  %v482 = vpack.c.b16 %v377, %v376
  %v483 = vpack.c.b16 %v379, %v378
  %v484 = vpack.c.b16 %v381, %v380
  %v485 = vpack.c.b16 %v383, %v382
  %v486 = vpack.c.b16 %v385, %v384
  %v487 = vpack.c.b16 %v387, %v386
  %v488 = vpack.c.b16 %v389, %v388
  %v489 = vpack.c.b16 %v391, %v390
  %v490 = vpack.c.b16 %v393, %v392
  %v491 = vpack.c.b16 %v395, %v394
  %v492 = vpack.c.b16 %v397, %v396
  %v493 = vpack.c.b16 %v399, %v398
  %v494 = vpack.c.b16 %v401, %v400
  %v495 = vpack.c.b16 %v403, %v402
  %v496 = vpack.c.b16 %v405, %v404
  %v497 = vpack.c.b16 %v407, %v406
  %v498 = vpack.c.b16 %v409, %v408
  %v499 = vpack.c.b16 %v411, %v410
  %v500 = vpack.c.b16 %v413, %v412
  %v501 = vpack.c.b16 %v415, %v414
  %v502 = vpack.c.b16 %v417, %v416
  %v503 = vpack.c.b16 %v419, %v418
  %v504 = vpack.c.b16 %v421, %v420
  %v505 = vpack.c.b16 %v423, %v422
  %v506 = vpack.c.b16 %v425, %v424
  %v507 = vpack.c.b16 %v427, %v426
  %v508 = vpack.c.b16 %v429, %v428
  %v509 = vpack.c.b16 %v431, %v430
  %v510 = vpack.c.b16 %v433, %v432
  %v511 = vpack.c.b16 %v435, %v434
  %v512 = vpack.c.b16 %v437, %v436
  %v513 = vpack.c.b16 %v439, %v438
  %v514 = vpack.c.b16 %v441, %v440
  %v515 = vpack.c.b16 %v443, %v442
  %v516 = vpack.c.b16 %v445, %v444
  %v517 = vpack.c.b16 %v447, %v446
  %v518 = vpack.c.b16 %v449, %v448
  %v519 = vpack.c.b16 %v451, %v450
  %v520 = vpack.c.b16 %v453, %v452
  %v521 = vpack.c.b16 %v455, %v454
  %v522 = vpack.c.b16 %v457, %v456
  %v523 = vpack.c.b16 %v459, %v458
  %588 = vmatprep.subr.bf16.mxu0 0
  %589 = vmatpush1.bf16.msra.mxu0 %v460
  %590 = vmatprep.subr.bf16.mxu0 0
  %591 = vmatpush1.bf16.msra.mxu0 %v461
  %592 = vmatprep.subr.bf16.mxu0 0
  %593 = vmatpush1.bf16.msra.mxu0 %v462
  %594 = vmatprep.subr.bf16.mxu0 0
  %595 = vmatpush1.bf16.msra.mxu0 %v463
  %596 = vmatprep.subr.bf16.mxu0 0
  %597 = vmatpush1.bf16.msra.mxu0 %v464
  %598 = vmatprep.subr.bf16.mxu0 0
  %599 = vmatpush1.bf16.msra.mxu0 %v465
  %600 = vmatprep.subr.bf16.mxu0 0
  %601 = vmatpush1.bf16.msra.mxu0 %v466
  %602 = vmatprep.subr.bf16.mxu0 0
  %603 = vmatpush1.bf16.msra.mxu0 %v467
  %604 = vmatprep.subr.bf16.mxu0 0
  %605 = vmatpush1.bf16.msra.mxu0 %v468
  %606 = vmatprep.subr.bf16.mxu0 0
  %607 = vmatpush1.bf16.msra.mxu0 %v469
  %608 = vmatprep.subr.bf16.mxu0 0
  %609 = vmatpush1.bf16.msra.mxu0 %v470
  %610 = vmatprep.subr.bf16.mxu0 0
  %611 = vmatpush1.bf16.msra.mxu0 %v471
  %612 = vmatprep.subr.bf16.mxu0 0
  %613 = vmatpush1.bf16.msra.mxu0 %v472
  %614 = vmatprep.subr.bf16.mxu0 0
  %615 = vmatpush1.bf16.msra.mxu0 %v473
  %616 = vmatprep.subr.bf16.mxu0 0
  %617 = vmatpush1.bf16.msra.mxu0 %v474
  %618 = vmatprep.subr.bf16.mxu0 0
  %619 = vmatpush1.bf16.msra.mxu0 %v475
  %620 = vmatprep.mubr.bf16.mxu0 %v184
  %621 = vmatmul.mubr.bf16.gmra.mrb[0].mxu0 %v170
  %v622 = vpop.f32.mrb[0].mxu0
  %v623 = vadd.f32 0.0, %v622
  %v624 = vpop.f32.mrb[0].mxu0
  %v625 = vpop.f32.mrb[0].mxu0
  %v626 = vpop.f32.mrb[0].mxu0
  %627 = vdwg.mxu0
  %628 = vmatprep.subr.bf16.mxu0 0
  %629 = vmatpush1.bf16.msra.mxu0 %v476
  %630 = vmatprep.subr.bf16.mxu0 0
  %631 = vmatpush1.bf16.msra.mxu0 %v477
  %632 = vmatprep.subr.bf16.mxu0 0
  %633 = vmatpush1.bf16.msra.mxu0 %v478
  %634 = vmatprep.subr.bf16.mxu0 0
  %635 = vmatpush1.bf16.msra.mxu0 %v479
  %636 = vmatprep.subr.bf16.mxu0 0
  %637 = vmatpush1.bf16.msra.mxu0 %v480
  %638 = vmatprep.subr.bf16.mxu0 0
  %639 = vmatpush1.bf16.msra.mxu0 %v481
  %640 = vmatprep.subr.bf16.mxu0 0
  %641 = vmatpush1.bf16.msra.mxu0 %v482
  %642 = vmatprep.subr.bf16.mxu0 0
  %643 = vmatpush1.bf16.msra.mxu0 %v483
  %644 = vmatprep.subr.bf16.mxu0 0
  %645 = vmatpush1.bf16.msra.mxu0 %v484
  %646 = vmatprep.subr.bf16.mxu0 0
  %647 = vmatpush1.bf16.msra.mxu0 %v485
  %648 = vmatprep.subr.bf16.mxu0 0
  %649 = vmatpush1.bf16.msra.mxu0 %v486
  %650 = vmatprep.subr.bf16.mxu0 0
  %651 = vmatpush1.bf16.msra.mxu0 %v487
  %652 = vmatprep.subr.bf16.mxu0 0
  %653 = vmatpush1.bf16.msra.mxu0 %v488
  %654 = vmatprep.subr.bf16.mxu0 0
  %655 = vmatpush1.bf16.msra.mxu0 %v489
  %656 = vmatprep.subr.bf16.mxu0 0
  %657 = vmatpush1.bf16.msra.mxu0 %v490
  %658 = vmatprep.subr.bf16.mxu0 0
  %659 = vmatpush1.bf16.msra.mxu0 %v491
  %660 = vmatprep.mubr.bf16.mxu0 %v194
  %661 = vmatmul.mubr.bf16.gmra.mrb[0].mxu0 %v192
  %v662 = vpop.f32.mrb[0].mxu0
  %v663 = vadd.f32 %v623, %v662
  %v664 = vpop.f32.mrb[0].mxu0
  %v665 = vpop.f32.mrb[0].mxu0
  %v666 = vpop.f32.mrb[0].mxu0
  %667 = vdwg.mxu0
  %668 = vmatprep.subr.bf16.mxu0 0
  %669 = vmatpush1.bf16.msra.mxu0 %v492
  %670 = vmatprep.subr.bf16.mxu0 0
  %671 = vmatpush1.bf16.msra.mxu0 %v493
  %672 = vmatprep.subr.bf16.mxu0 0
  %673 = vmatpush1.bf16.msra.mxu0 %v494
  %674 = vmatprep.subr.bf16.mxu0 0
  %675 = vmatpush1.bf16.msra.mxu0 %v495
  %676 = vmatprep.subr.bf16.mxu0 0
  %677 = vmatpush1.bf16.msra.mxu0 %v496
  %678 = vmatprep.subr.bf16.mxu0 0
  %679 = vmatpush1.bf16.msra.mxu0 %v497
  %680 = vmatprep.subr.bf16.mxu0 0
  %681 = vmatpush1.bf16.msra.mxu0 %v498
  %682 = vmatprep.subr.bf16.mxu0 0
  %683 = vmatpush1.bf16.msra.mxu0 %v499
  %684 = vmatprep.subr.bf16.mxu0 0
  %685 = vmatpush1.bf16.msra.mxu0 %v500
  %686 = vmatprep.subr.bf16.mxu0 0
  %687 = vmatpush1.bf16.msra.mxu0 %v501
  %688 = vmatprep.subr.bf16.mxu0 0
  %689 = vmatpush1.bf16.msra.mxu0 %v502
  %690 = vmatprep.subr.bf16.mxu0 0
  %691 = vmatpush1.bf16.msra.mxu0 %v503
  %692 = vmatprep.subr.bf16.mxu0 0
  %693 = vmatpush1.bf16.msra.mxu0 %v504
  %694 = vmatprep.subr.bf16.mxu0 0
  %695 = vmatpush1.bf16.msra.mxu0 %v505
  %696 = vmatprep.subr.bf16.mxu0 0
  %697 = vmatpush1.bf16.msra.mxu0 %v506
  %698 = vmatprep.subr.bf16.mxu0 0
  %699 = vmatpush1.bf16.msra.mxu0 %v507
  %700 = vmatprep.mubr.bf16.mxu0 %v191
  %701 = vmatmul.mubr.bf16.gmra.mrb[0].mxu0 %v177
  %v702 = vpop.f32.mrb[0].mxu0
  %v703 = vadd.f32 %v663, %v702
  %v704 = vpop.f32.mrb[0].mxu0
  %v705 = vpop.f32.mrb[0].mxu0
  %v706 = vpop.f32.mrb[0].mxu0
  %707 = vdwg.mxu0
  %708 = vmatprep.subr.bf16.mxu0 0
  %709 = vmatpush1.bf16.msra.mxu0 %v508
  %710 = vmatprep.subr.bf16.mxu0 0
  %711 = vmatpush1.bf16.msra.mxu0 %v509
  %712 = vmatprep.subr.bf16.mxu0 0
  %713 = vmatpush1.bf16.msra.mxu0 %v510
  %714 = vmatprep.subr.bf16.mxu0 0
  %715 = vmatpush1.bf16.msra.mxu0 %v511
  %716 = vmatprep.subr.bf16.mxu0 0
  %717 = vmatpush1.bf16.msra.mxu0 %v512
  %718 = vmatprep.subr.bf16.mxu0 0
  %719 = vmatpush1.bf16.msra.mxu0 %v513
  %720 = vmatprep.subr.bf16.mxu0 0
  %721 = vmatpush1.bf16.msra.mxu0 %v514
  %722 = vmatprep.subr.bf16.mxu0 0
  %723 = vmatpush1.bf16.msra.mxu0 %v515
  %724 = vmatprep.subr.bf16.mxu0 0
  %725 = vmatpush1.bf16.msra.mxu0 %v516
  %726 = vmatprep.subr.bf16.mxu0 0
  %727 = vmatpush1.bf16.msra.mxu0 %v517
  %728 = vmatprep.subr.bf16.mxu0 0
  %729 = vmatpush1.bf16.msra.mxu0 %v518
  %730 = vmatprep.subr.bf16.mxu0 0
  %731 = vmatpush1.bf16.msra.mxu0 %v519
  %732 = vmatprep.subr.bf16.mxu0 0
  %733 = vmatpush1.bf16.msra.mxu0 %v520
  %734 = vmatprep.subr.bf16.mxu0 0
  %735 = vmatpush1.bf16.msra.mxu0 %v521
  %736 = vmatprep.subr.bf16.mxu0 0
  %737 = vmatpush1.bf16.msra.mxu0 %v522
  %738 = vmatprep.subr.bf16.mxu0 0
  %739 = vmatpush1.bf16.msra.mxu0 %v523
  %740 = vmatprep.mubr.bf16.mxu0 %v195
  %741 = vmatmul.mubr.bf16.gmra.mrb[0].mxu0 %v193
  %v742 = vpop.f32.mrb[0].mxu0
  %v743 = vadd.f32 %v703, %v742
  %v744 = vpop.f32.mrb[0].mxu0
  %v745 = vpop.f32.mrb[0].mxu0
  %v746 = vpop.f32.mrb[0].mxu0
  %747 = vdwg.mxu0
  %vm748 = vcmask 254976
  %749 = vst.msk [vmem:[%s3] sm:$0x3] %vm748, %v743
  %v750 = vld [vmem:[%s2] sm:$0xf]
  %v751 = vld [vmem:[%s2 + $0x4] sm:$0xf]
  %v752 = vld [vmem:[%s2 + $0x8] sm:$0xf]
  %v753 = vld [vmem:[%s2 + $0xc] sm:$0xf]
  %v754 = vld [vmem:[%s2 + $0x10] sm:$0xf]
  %v755 = vld [vmem:[%s2 + $0x14] sm:$0xf]
  %v756 = vld [vmem:[%s2 + $0x18] sm:$0xf]
  %v757 = vld [vmem:[%s2 + $0x1c] sm:$0xf]
  %v758 = vld [vmem:[%s2 + $0x20] sm:$0xf]
  %v759 = vld [vmem:[%s2 + $0x24] sm:$0xf]
  %v760 = vld [vmem:[%s2 + $0x28] sm:$0xf]
  %v761 = vld [vmem:[%s2 + $0x2c] sm:$0xf]
  %v762 = vld [vmem:[%s2 + $0x30] sm:$0xf]
  %v763 = vld [vmem:[%s2 + $0x34] sm:$0xf]
  %v764 = vld [vmem:[%s2 + $0x38] sm:$0xf]
  %v765 = vld [vmem:[%s2 + $0x3c] sm:$0xf]
  %v766 = vld [vmem:[%s2 + $0x40] sm:$0xf]
  %v767 = vld [vmem:[%s2 + $0x44] sm:$0xf]
  %v768 = vld [vmem:[%s2 + $0x48] sm:$0xf]
  %v769 = vld [vmem:[%s2 + $0x4c] sm:$0xf]
  %v770 = vld [vmem:[%s2 + $0x50] sm:$0xf]
  %v771 = vld [vmem:[%s2 + $0x54] sm:$0xf]
  %v772 = vld [vmem:[%s2 + $0x58] sm:$0xf]
  %v773 = vld [vmem:[%s2 + $0x5c] sm:$0xf]
  %v774 = vld [vmem:[%s2 + $0x60] sm:$0xf]
  %v775 = vld [vmem:[%s2 + $0x64] sm:$0xf]
  %v776 = vld [vmem:[%s2 + $0x68] sm:$0xf]
  %v777 = vld [vmem:[%s2 + $0x6c] sm:$0xf]
  %v778 = vld [vmem:[%s2 + $0x70] sm:$0xf]
  %v779 = vld [vmem:[%s2 + $0x74] sm:$0xf]
  %v780 = vld [vmem:[%s2 + $0x78] sm:$0xf]
  %v781 = vld [vmem:[%s2 + $0x7c] sm:$0xf]
  %v782 = vld [vmem:[%s2 + $0x80] sm:$0xf]
  %v783 = vld [vmem:[%s2 + $0x84] sm:$0xf]
  %v784 = vld [vmem:[%s2 + $0x88] sm:$0xf]
  %v785 = vld [vmem:[%s2 + $0x8c] sm:$0xf]
  %v786 = vld [vmem:[%s2 + $0x90] sm:$0xf]
  %v787 = vld [vmem:[%s2 + $0x94] sm:$0xf]
  %v788 = vld [vmem:[%s2 + $0x98] sm:$0xf]
  %v789 = vld [vmem:[%s2 + $0x9c] sm:$0xf]
  %v790 = vld [vmem:[%s2 + $0xa0] sm:$0xf]
  %v791 = vld [vmem:[%s2 + $0xa4] sm:$0xf]
  %v792 = vld [vmem:[%s2 + $0xa8] sm:$0xf]
  %v793 = vld [vmem:[%s2 + $0xac] sm:$0xf]
  %v794 = vld [vmem:[%s2 + $0xb0] sm:$0xf]
  %v795 = vld [vmem:[%s2 + $0xb4] sm:$0xf]
  %v796 = vld [vmem:[%s2 + $0xb8] sm:$0xf]
  %v797 = vld [vmem:[%s2 + $0xbc] sm:$0xf]
  %v798 = vld [vmem:[%s2 + $0xc0] sm:$0xf]
  %v799 = vld [vmem:[%s2 + $0xc4] sm:$0xf]
  %v800 = vld [vmem:[%s2 + $0xc8] sm:$0xf]
  %v801 = vld [vmem:[%s2 + $0xcc] sm:$0xf]
  %v802 = vld [vmem:[%s2 + $0xd0] sm:$0xf]
  %v803 = vld [vmem:[%s2 + $0xd4] sm:$0xf]
  %v804 = vld [vmem:[%s2 + $0xd8] sm:$0xf]
  %v805 = vld [vmem:[%s2 + $0xdc] sm:$0xf]
  %v806 = vld [vmem:[%s2 + $0xe0] sm:$0xf]
  %v807 = vld [vmem:[%s2 + $0xe4] sm:$0xf]
  %v808 = vld [vmem:[%s2 + $0xe8] sm:$0xf]
  %v809 = vld [vmem:[%s2 + $0xec] sm:$0xf]
  %v810 = vld [vmem:[%s2 + $0xf0] sm:$0xf]
  %v811 = vld [vmem:[%s2 + $0xf4] sm:$0xf]
  %v812 = vld [vmem:[%s2 + $0xf8] sm:$0xf]
  %v813 = vld [vmem:[%s2 + $0xfc] sm:$0xf]
  %v814 = vld [vmem:[%s2 + $0x100] sm:$0xf]
  %v815 = vld [vmem:[%s2 + $0x104] sm:$0xf]
  %v816 = vld [vmem:[%s2 + $0x108] sm:$0xf]
  %v817 = vld [vmem:[%s2 + $0x10c] sm:$0xf]
  %v818 = vld [vmem:[%s2 + $0x110] sm:$0xf]
  %v819 = vld [vmem:[%s2 + $0x114] sm:$0xf]
  %v820 = vld [vmem:[%s2 + $0x118] sm:$0xf]
  %v821 = vld [vmem:[%s2 + $0x11c] sm:$0xf]
  %v822 = vld [vmem:[%s2 + $0x120] sm:$0xf]
  %v823 = vld [vmem:[%s2 + $0x124] sm:$0xf]
  %v824 = vld [vmem:[%s2 + $0x128] sm:$0xf]
  %v825 = vld [vmem:[%s2 + $0x12c] sm:$0xf]
  %v826 = vld [vmem:[%s2 + $0x130] sm:$0xf]
  %v827 = vld [vmem:[%s2 + $0x134] sm:$0xf]
  %v828 = vld [vmem:[%s2 + $0x138] sm:$0xf]
  %v829 = vld [vmem:[%s2 + $0x13c] sm:$0xf]
  %v830 = vld [vmem:[%s2 + $0x140] sm:$0xf]
  %v831 = vld [vmem:[%s2 + $0x144] sm:$0xf]
  %v832 = vld [vmem:[%s2 + $0x148] sm:$0xf]
  %v833 = vld [vmem:[%s2 + $0x14c] sm:$0xf]
  %v834 = vld [vmem:[%s2 + $0x150] sm:$0xf]
  %v835 = vld [vmem:[%s2 + $0x154] sm:$0xf]
  %v836 = vld [vmem:[%s2 + $0x158] sm:$0xf]
  %v837 = vld [vmem:[%s2 + $0x15c] sm:$0xf]
  %v838 = vld [vmem:[%s2 + $0x160] sm:$0xf]
  %v839 = vld [vmem:[%s2 + $0x164] sm:$0xf]
  %v840 = vld [vmem:[%s2 + $0x168] sm:$0xf]
  %v841 = vld [vmem:[%s2 + $0x16c] sm:$0xf]
  %v842 = vld [vmem:[%s2 + $0x170] sm:$0xf]
  %v843 = vld [vmem:[%s2 + $0x174] sm:$0xf]
  %v844 = vld [vmem:[%s2 + $0x178] sm:$0xf]
  %v845 = vld [vmem:[%s2 + $0x17c] sm:$0xf]
  %v846 = vld [vmem:[%s2 + $0x180] sm:$0xf]
  %v847 = vld [vmem:[%s2 + $0x184] sm:$0xf]
  %v848 = vld [vmem:[%s2 + $0x188] sm:$0xf]
  %v849 = vld [vmem:[%s2 + $0x18c] sm:$0xf]
  %v850 = vld [vmem:[%s2 + $0x190] sm:$0xf]
  %v851 = vld [vmem:[%s2 + $0x194] sm:$0xf]
  %v852 = vld [vmem:[%s2 + $0x198] sm:$0xf]
  %v853 = vld [vmem:[%s2 + $0x19c] sm:$0xf]
  %v854 = vld [vmem:[%s2 + $0x1a0] sm:$0xf]
  %v855 = vld [vmem:[%s2 + $0x1a4] sm:$0xf]
  %v856 = vld [vmem:[%s2 + $0x1a8] sm:$0xf]
  %v857 = vld [vmem:[%s2 + $0x1ac] sm:$0xf]
  %v858 = vld [vmem:[%s2 + $0x1b0] sm:$0xf]
  %v859 = vld [vmem:[%s2 + $0x1b4] sm:$0xf]
  %v860 = vld [vmem:[%s2 + $0x1b8] sm:$0xf]
  %v861 = vld [vmem:[%s2 + $0x1bc] sm:$0xf]
  %v862 = vld [vmem:[%s2 + $0x1c0] sm:$0xf]
  %v863 = vld [vmem:[%s2 + $0x1c4] sm:$0xf]
  %v864 = vld [vmem:[%s2 + $0x1c8] sm:$0xf]
  %v865 = vld [vmem:[%s2 + $0x1cc] sm:$0xf]
  %v866 = vld [vmem:[%s2 + $0x1d0] sm:$0xf]
  %v867 = vld [vmem:[%s2 + $0x1d4] sm:$0xf]
  %v868 = vld [vmem:[%s2 + $0x1d8] sm:$0xf]
  %v869 = vld [vmem:[%s2 + $0x1dc] sm:$0xf]
  %v870 = vld [vmem:[%s2 + $0x1e0] sm:$0xf]
  %v871 = vld [vmem:[%s2 + $0x1e4] sm:$0xf]
  %v872 = vld [vmem:[%s2 + $0x1e8] sm:$0xf]
  %v873 = vld [vmem:[%s2 + $0x1ec] sm:$0xf]
  %v874 = vld [vmem:[%s2 + $0x1f0] sm:$0xf]
  %v875 = vld [vmem:[%s2 + $0x1f4] sm:$0xf]
  %v876 = vld [vmem:[%s2 + $0x1f8] sm:$0xf]
  %v877 = vld [vmem:[%s2 + $0x1fc] sm:$0xf]
  %v1006 = vunpack.c.l.b16 %v750
  %v1007 = vunpack.c.l.b16 %v751
  %v1008 = vunpack.c.l.b16 %v752
  %v1009 = vunpack.c.l.b16 %v753
  %v1010 = vunpack.c.l.b16 %v754
  %v1011 = vunpack.c.l.b16 %v755
  %v1012 = vunpack.c.l.b16 %v756
  %v1013 = vunpack.c.l.b16 %v757
  %v1014 = vunpack.c.l.b16 %v758
  %v1015 = vunpack.c.l.b16 %v759
  %v1016 = vunpack.c.l.b16 %v760
  %v1017 = vunpack.c.l.b16 %v761
  %v1018 = vunpack.c.l.b16 %v762
  %v1019 = vunpack.c.l.b16 %v763
  %v1020 = vunpack.c.l.b16 %v764
  %v1021 = vunpack.c.l.b16 %v765
  %v1022 = vunpack.c.l.b16 %v766
  %v1023 = vunpack.c.l.b16 %v767
  %v1024 = vunpack.c.l.b16 %v768
  %v1025 = vunpack.c.l.b16 %v769
  %v1026 = vunpack.c.l.b16 %v770
  %v1027 = vunpack.c.l.b16 %v771
  %v1028 = vunpack.c.l.b16 %v772
  %v1029 = vunpack.c.l.b16 %v773
  %v1030 = vunpack.c.l.b16 %v774
  %v1031 = vunpack.c.l.b16 %v775
  %v1032 = vunpack.c.l.b16 %v776
  %v1033 = vunpack.c.l.b16 %v777
  %v1034 = vunpack.c.l.b16 %v778
  %v1035 = vunpack.c.l.b16 %v779
  %v1036 = vunpack.c.l.b16 %v780
  %v1037 = vunpack.c.l.b16 %v781
  %v1038 = vunpack.c.l.b16 %v782
  %v1039 = vunpack.c.l.b16 %v783
  %v1040 = vunpack.c.l.b16 %v784
  %v1041 = vunpack.c.l.b16 %v785
  %v1042 = vunpack.c.l.b16 %v786
  %v1043 = vunpack.c.l.b16 %v787
  %v1044 = vunpack.c.l.b16 %v788
  %v1045 = vunpack.c.l.b16 %v789
  %v1046 = vunpack.c.l.b16 %v790
  %v1047 = vunpack.c.l.b16 %v791
  %v1048 = vunpack.c.l.b16 %v792
  %v1049 = vunpack.c.l.b16 %v793
  %v1050 = vunpack.c.l.b16 %v794
  %v1051 = vunpack.c.l.b16 %v795
  %v1052 = vunpack.c.l.b16 %v796
  %v1053 = vunpack.c.l.b16 %v797
  %v1054 = vunpack.c.l.b16 %v798
  %v1055 = vunpack.c.l.b16 %v799
  %v1056 = vunpack.c.l.b16 %v800
  %v1057 = vunpack.c.l.b16 %v801
  %v1058 = vunpack.c.l.b16 %v802
  %v1059 = vunpack.c.l.b16 %v803
  %v1060 = vunpack.c.l.b16 %v804
  %v1061 = vunpack.c.l.b16 %v805
  %v1062 = vunpack.c.l.b16 %v806
  %v1063 = vunpack.c.l.b16 %v807
  %v1064 = vunpack.c.l.b16 %v808
  %v1065 = vunpack.c.l.b16 %v809
  %v1066 = vunpack.c.l.b16 %v810
  %v1067 = vunpack.c.l.b16 %v811
  %v1068 = vunpack.c.l.b16 %v812
  %v1069 = vunpack.c.l.b16 %v813
  %v1070 = vunpack.c.l.b16 %v814
  %v1071 = vunpack.c.l.b16 %v815
  %v1072 = vunpack.c.l.b16 %v816
  %v1073 = vunpack.c.l.b16 %v817
  %v1074 = vunpack.c.l.b16 %v818
  %v1075 = vunpack.c.l.b16 %v819
  %v1076 = vunpack.c.l.b16 %v820
  %v1077 = vunpack.c.l.b16 %v821
  %v1078 = vunpack.c.l.b16 %v822
  %v1079 = vunpack.c.l.b16 %v823
  %v1080 = vunpack.c.l.b16 %v824
  %v1081 = vunpack.c.l.b16 %v825
  %v1082 = vunpack.c.l.b16 %v826
  %v1083 = vunpack.c.l.b16 %v827
  %v1084 = vunpack.c.l.b16 %v828
  %v1085 = vunpack.c.l.b16 %v829
  %v1086 = vunpack.c.l.b16 %v830
  %v1087 = vunpack.c.l.b16 %v831
  %v1088 = vunpack.c.l.b16 %v832
  %v1089 = vunpack.c.l.b16 %v833
  %v1090 = vunpack.c.l.b16 %v834
  %v1091 = vunpack.c.l.b16 %v835
  %v1092 = vunpack.c.l.b16 %v836
  %v1093 = vunpack.c.l.b16 %v837
  %v1094 = vunpack.c.l.b16 %v838
  %v1095 = vunpack.c.l.b16 %v839
  %v1096 = vunpack.c.l.b16 %v840
  %v1097 = vunpack.c.l.b16 %v841
  %v1098 = vunpack.c.l.b16 %v842
  %v1099 = vunpack.c.l.b16 %v843
  %v1100 = vunpack.c.l.b16 %v844
  %v1101 = vunpack.c.l.b16 %v845
  %v1102 = vunpack.c.l.b16 %v846
  %v1103 = vunpack.c.l.b16 %v847
  %v1104 = vunpack.c.l.b16 %v848
  %v1105 = vunpack.c.l.b16 %v849
  %v1106 = vunpack.c.l.b16 %v850
  %v1107 = vunpack.c.l.b16 %v851
  %v1108 = vunpack.c.l.b16 %v852
  %v1109 = vunpack.c.l.b16 %v853
  %v1110 = vunpack.c.l.b16 %v854
  %v1111 = vunpack.c.l.b16 %v855
  %v1112 = vunpack.c.l.b16 %v856
  %v1113 = vunpack.c.l.b16 %v857
  %v1114 = vunpack.c.l.b16 %v858
  %v1115 = vunpack.c.l.b16 %v859
  %v1116 = vunpack.c.l.b16 %v860
  %v1117 = vunpack.c.l.b16 %v861
  %v1118 = vunpack.c.l.b16 %v862
  %v1119 = vunpack.c.l.b16 %v863
  %v1120 = vunpack.c.l.b16 %v864
  %v1121 = vunpack.c.l.b16 %v865
  %v1122 = vunpack.c.l.b16 %v866
  %v1123 = vunpack.c.l.b16 %v867
  %v1124 = vunpack.c.l.b16 %v868
  %v1125 = vunpack.c.l.b16 %v869
  %v1126 = vunpack.c.l.b16 %v870
  %v1127 = vunpack.c.l.b16 %v871
  %v1128 = vunpack.c.l.b16 %v872
  %v1129 = vunpack.c.l.b16 %v873
  %v1130 = vunpack.c.l.b16 %v874
  %v1131 = vunpack.c.l.b16 %v875
  %v1132 = vunpack.c.l.b16 %v876
  %v1133 = vunpack.c.l.b16 %v877
  %v1134 = vpack.c.b16 %v1007, %v1006
  %v1135 = vpack.c.b16 %v1009, %v1008
  %v1136 = vpack.c.b16 %v1011, %v1010
  %v1137 = vpack.c.b16 %v1013, %v1012
  %v1138 = vpack.c.b16 %v1015, %v1014
  %v1139 = vpack.c.b16 %v1017, %v1016
  %v1140 = vpack.c.b16 %v1019, %v1018
  %v1141 = vpack.c.b16 %v1021, %v1020
  %v1142 = vpack.c.b16 %v1023, %v1022
  %v1143 = vpack.c.b16 %v1025, %v1024
  %v1144 = vpack.c.b16 %v1027, %v1026
  %v1145 = vpack.c.b16 %v1029, %v1028
  %v1146 = vpack.c.b16 %v1031, %v1030
  %v1147 = vpack.c.b16 %v1033, %v1032
  %v1148 = vpack.c.b16 %v1035, %v1034
  %v1149 = vpack.c.b16 %v1037, %v1036
  %v1150 = vpack.c.b16 %v1039, %v1038
  %v1151 = vpack.c.b16 %v1041, %v1040
  %v1152 = vpack.c.b16 %v1043, %v1042
  %v1153 = vpack.c.b16 %v1045, %v1044
  %v1154 = vpack.c.b16 %v1047, %v1046
  %v1155 = vpack.c.b16 %v1049, %v1048
  %v1156 = vpack.c.b16 %v1051, %v1050
  %v1157 = vpack.c.b16 %v1053, %v1052
  %v1158 = vpack.c.b16 %v1055, %v1054
  %v1159 = vpack.c.b16 %v1057, %v1056
  %v1160 = vpack.c.b16 %v1059, %v1058
  %v1161 = vpack.c.b16 %v1061, %v1060
  %v1162 = vpack.c.b16 %v1063, %v1062
  %v1163 = vpack.c.b16 %v1065, %v1064
  %v1164 = vpack.c.b16 %v1067, %v1066
  %v1165 = vpack.c.b16 %v1069, %v1068
  %v1166 = vpack.c.b16 %v1071, %v1070
  %v1167 = vpack.c.b16 %v1073, %v1072
  %v1168 = vpack.c.b16 %v1075, %v1074
  %v1169 = vpack.c.b16 %v1077, %v1076
  %v1170 = vpack.c.b16 %v1079, %v1078
  %v1171 = vpack.c.b16 %v1081, %v1080
  %v1172 = vpack.c.b16 %v1083, %v1082
  %v1173 = vpack.c.b16 %v1085, %v1084
  %v1174 = vpack.c.b16 %v1087, %v1086
  %v1175 = vpack.c.b16 %v1089, %v1088
  %v1176 = vpack.c.b16 %v1091, %v1090
  %v1177 = vpack.c.b16 %v1093, %v1092
  %v1178 = vpack.c.b16 %v1095, %v1094
  %v1179 = vpack.c.b16 %v1097, %v1096
  %v1180 = vpack.c.b16 %v1099, %v1098
  %v1181 = vpack.c.b16 %v1101, %v1100
  %v1182 = vpack.c.b16 %v1103, %v1102
  %v1183 = vpack.c.b16 %v1105, %v1104
  %v1184 = vpack.c.b16 %v1107, %v1106
  %v1185 = vpack.c.b16 %v1109, %v1108
  %v1186 = vpack.c.b16 %v1111, %v1110
  %v1187 = vpack.c.b16 %v1113, %v1112
  %v1188 = vpack.c.b16 %v1115, %v1114
  %v1189 = vpack.c.b16 %v1117, %v1116
  %v1190 = vpack.c.b16 %v1119, %v1118
  %v1191 = vpack.c.b16 %v1121, %v1120
  %v1192 = vpack.c.b16 %v1123, %v1122
  %v1193 = vpack.c.b16 %v1125, %v1124
  %v1194 = vpack.c.b16 %v1127, %v1126
  %v1195 = vpack.c.b16 %v1129, %v1128
  %v1196 = vpack.c.b16 %v1131, %v1130
  %v1197 = vpack.c.b16 %v1133, %v1132
  %1262 = vmatprep.subr.bf16.mxu0 0
  %1263 = vmatpush1.bf16.msra.mxu0 %v1134
  %1264 = vmatprep.subr.bf16.mxu0 0
  %1265 = vmatpush1.bf16.msra.mxu0 %v1135
  %1266 = vmatprep.subr.bf16.mxu0 0
  %1267 = vmatpush1.bf16.msra.mxu0 %v1136
  %1268 = vmatprep.subr.bf16.mxu0 0
  %1269 = vmatpush1.bf16.msra.mxu0 %v1137
  %1270 = vmatprep.subr.bf16.mxu0 0
  %1271 = vmatpush1.bf16.msra.mxu0 %v1138
  %1272 = vmatprep.subr.bf16.mxu0 0
  %1273 = vmatpush1.bf16.msra.mxu0 %v1139
  %1274 = vmatprep.subr.bf16.mxu0 0
  %1275 = vmatpush1.bf16.msra.mxu0 %v1140
  %1276 = vmatprep.subr.bf16.mxu0 0
  %1277 = vmatpush1.bf16.msra.mxu0 %v1141
  %1278 = vmatprep.subr.bf16.mxu0 0
  %1279 = vmatpush1.bf16.msra.mxu0 %v1142
  %1280 = vmatprep.subr.bf16.mxu0 0
  %1281 = vmatpush1.bf16.msra.mxu0 %v1143
  %1282 = vmatprep.subr.bf16.mxu0 0
  %1283 = vmatpush1.bf16.msra.mxu0 %v1144
  %1284 = vmatprep.subr.bf16.mxu0 0
  %1285 = vmatpush1.bf16.msra.mxu0 %v1145
  %1286 = vmatprep.subr.bf16.mxu0 0
  %1287 = vmatpush1.bf16.msra.mxu0 %v1146
  %1288 = vmatprep.subr.bf16.mxu0 0
  %1289 = vmatpush1.bf16.msra.mxu0 %v1147
  %1290 = vmatprep.subr.bf16.mxu0 0
  %1291 = vmatpush1.bf16.msra.mxu0 %v1148
  %1292 = vmatprep.subr.bf16.mxu0 0
  %1293 = vmatpush1.bf16.msra.mxu0 %v1149
  %1294 = vmatprep.mubr.bf16.mxu0 %v184
  %1295 = vmatmul.mubr.bf16.gmra.mrb[0].mxu0 %v170
  %v1296 = vpop.f32.mrb[0].mxu0
  %v1297 = vadd.f32 0.0, %v1296
  %v1298 = vpop.f32.mrb[0].mxu0
  %v1299 = vpop.f32.mrb[0].mxu0
  %v1300 = vpop.f32.mrb[0].mxu0
  %1301 = vdwg.mxu0
  %1302 = vmatprep.subr.bf16.mxu0 0
  %1303 = vmatpush1.bf16.msra.mxu0 %v1150
  %1304 = vmatprep.subr.bf16.mxu0 0
  %1305 = vmatpush1.bf16.msra.mxu0 %v1151
  %1306 = vmatprep.subr.bf16.mxu0 0
  %1307 = vmatpush1.bf16.msra.mxu0 %v1152
  %1308 = vmatprep.subr.bf16.mxu0 0
  %1309 = vmatpush1.bf16.msra.mxu0 %v1153
  %1310 = vmatprep.subr.bf16.mxu0 0
  %1311 = vmatpush1.bf16.msra.mxu0 %v1154
  %1312 = vmatprep.subr.bf16.mxu0 0
  %1313 = vmatpush1.bf16.msra.mxu0 %v1155
  %1314 = vmatprep.subr.bf16.mxu0 0
  %1315 = vmatpush1.bf16.msra.mxu0 %v1156
  %1316 = vmatprep.subr.bf16.mxu0 0
  %1317 = vmatpush1.bf16.msra.mxu0 %v1157
  %1318 = vmatprep.subr.bf16.mxu0 0
  %1319 = vmatpush1.bf16.msra.mxu0 %v1158
  %1320 = vmatprep.subr.bf16.mxu0 0
  %1321 = vmatpush1.bf16.msra.mxu0 %v1159
  %1322 = vmatprep.subr.bf16.mxu0 0
  %1323 = vmatpush1.bf16.msra.mxu0 %v1160
  %1324 = vmatprep.subr.bf16.mxu0 0
  %1325 = vmatpush1.bf16.msra.mxu0 %v1161
  %1326 = vmatprep.subr.bf16.mxu0 0
  %1327 = vmatpush1.bf16.msra.mxu0 %v1162
  %1328 = vmatprep.subr.bf16.mxu0 0
  %1329 = vmatpush1.bf16.msra.mxu0 %v1163
  %1330 = vmatprep.subr.bf16.mxu0 0
  %1331 = vmatpush1.bf16.msra.mxu0 %v1164
  %1332 = vmatprep.subr.bf16.mxu0 0
  %1333 = vmatpush1.bf16.msra.mxu0 %v1165
  %1334 = vmatprep.mubr.bf16.mxu0 %v194
  %1335 = vmatmul.mubr.bf16.gmra.mrb[0].mxu0 %v192
  %v1336 = vpop.f32.mrb[0].mxu0
  %v1337 = vadd.f32 %v1297, %v1336
  %v1338 = vpop.f32.mrb[0].mxu0
  %v1339 = vpop.f32.mrb[0].mxu0
  %v1340 = vpop.f32.mrb[0].mxu0
  %1341 = vdwg.mxu0
  %1342 = vmatprep.subr.bf16.mxu0 0
  %1343 = vmatpush1.bf16.msra.mxu0 %v1166
  %1344 = vmatprep.subr.bf16.mxu0 0
  %1345 = vmatpush1.bf16.msra.mxu0 %v1167
  %1346 = vmatprep.subr.bf16.mxu0 0
  %1347 = vmatpush1.bf16.msra.mxu0 %v1168
  %1348 = vmatprep.subr.bf16.mxu0 0
  %1349 = vmatpush1.bf16.msra.mxu0 %v1169
  %1350 = vmatprep.subr.bf16.mxu0 0
  %1351 = vmatpush1.bf16.msra.mxu0 %v1170
  %1352 = vmatprep.subr.bf16.mxu0 0
  %1353 = vmatpush1.bf16.msra.mxu0 %v1171
  %1354 = vmatprep.subr.bf16.mxu0 0
  %1355 = vmatpush1.bf16.msra.mxu0 %v1172
  %1356 = vmatprep.subr.bf16.mxu0 0
  %1357 = vmatpush1.bf16.msra.mxu0 %v1173
  %1358 = vmatprep.subr.bf16.mxu0 0
  %1359 = vmatpush1.bf16.msra.mxu0 %v1174
  %1360 = vmatprep.subr.bf16.mxu0 0
  %1361 = vmatpush1.bf16.msra.mxu0 %v1175
  %1362 = vmatprep.subr.bf16.mxu0 0
  %1363 = vmatpush1.bf16.msra.mxu0 %v1176
  %1364 = vmatprep.subr.bf16.mxu0 0
  %1365 = vmatpush1.bf16.msra.mxu0 %v1177
  %1366 = vmatprep.subr.bf16.mxu0 0
  %1367 = vmatpush1.bf16.msra.mxu0 %v1178
  %1368 = vmatprep.subr.bf16.mxu0 0
  %1369 = vmatpush1.bf16.msra.mxu0 %v1179
  %1370 = vmatprep.subr.bf16.mxu0 0
  %1371 = vmatpush1.bf16.msra.mxu0 %v1180
  %1372 = vmatprep.subr.bf16.mxu0 0
  %1373 = vmatpush1.bf16.msra.mxu0 %v1181
  %1374 = vmatprep.mubr.bf16.mxu0 %v191
  %1375 = vmatmul.mubr.bf16.gmra.mrb[0].mxu0 %v177
  %v1376 = vpop.f32.mrb[0].mxu0
  %v1377 = vadd.f32 %v1337, %v1376
  %v1378 = vpop.f32.mrb[0].mxu0
  %v1379 = vpop.f32.mrb[0].mxu0
  %v1380 = vpop.f32.mrb[0].mxu0
  %1381 = vdwg.mxu0
  %1382 = vmatprep.subr.bf16.mxu0 0
  %1383 = vmatpush1.bf16.msra.mxu0 %v1182
  %1384 = vmatprep.subr.bf16.mxu0 0
  %1385 = vmatpush1.bf16.msra.mxu0 %v1183
  %1386 = vmatprep.subr.bf16.mxu0 0
  %1387 = vmatpush1.bf16.msra.mxu0 %v1184
  %1388 = vmatprep.subr.bf16.mxu0 0
  %1389 = vmatpush1.bf16.msra.mxu0 %v1185
  %1390 = vmatprep.subr.bf16.mxu0 0
  %1391 = vmatpush1.bf16.msra.mxu0 %v1186
  %1392 = vmatprep.subr.bf16.mxu0 0
  %1393 = vmatpush1.bf16.msra.mxu0 %v1187
  %1394 = vmatprep.subr.bf16.mxu0 0
  %1395 = vmatpush1.bf16.msra.mxu0 %v1188
  %1396 = vmatprep.subr.bf16.mxu0 0
  %1397 = vmatpush1.bf16.msra.mxu0 %v1189
  %1398 = vmatprep.subr.bf16.mxu0 0
  %1399 = vmatpush1.bf16.msra.mxu0 %v1190
  %1400 = vmatprep.subr.bf16.mxu0 0
  %1401 = vmatpush1.bf16.msra.mxu0 %v1191
  %1402 = vmatprep.subr.bf16.mxu0 0
  %1403 = vmatpush1.bf16.msra.mxu0 %v1192
  %1404 = vmatprep.subr.bf16.mxu0 0
  %1405 = vmatpush1.bf16.msra.mxu0 %v1193
  %1406 = vmatprep.subr.bf16.mxu0 0
  %1407 = vmatpush1.bf16.msra.mxu0 %v1194
  %1408 = vmatprep.subr.bf16.mxu0 0
  %1409 = vmatpush1.bf16.msra.mxu0 %v1195
  %1410 = vmatprep.subr.bf16.mxu0 0
  %1411 = vmatpush1.bf16.msra.mxu0 %v1196
  %1412 = vmatprep.subr.bf16.mxu0 0
  %1413 = vmatpush1.bf16.msra.mxu0 %v1197
  %1414 = vmatprep.mubr.bf16.mxu0 %v195
  %1415 = vmatmul.mubr.bf16.gmra.mrb[0].mxu0 %v193
  %v1416 = vpop.f32.mrb[0].mxu0
  %v1417 = vadd.f32 %v1377, %v1416
  %v1418 = vpop.f32.mrb[0].mxu0
  %v1419 = vpop.f32.mrb[0].mxu0
  %v1420 = vpop.f32.mrb[0].mxu0
  %1421 = vdwg.mxu0
  %1422 = vst [vmem:[%s4] sm:$0x3] %v1417
  // Predicated region
  $region14: #{temperature_scaling_forward.1} parent=0 // pred_check
    _
  $region15: #{temperature_scaling_forward.1} parent=0 // pred_check_branch
    %1424 = sbr.rel (0) target = $region17
  $region16: #{temperature_scaling_forward.1} parent=0 // pred_region
    _
  $region17: #{temperature_scaling_forward.1} parent=0 // pred_fallthru
    _
  // Predicated region
  $region18: #{temperature_scaling_forward.1} parent=0 // pred_check
    _
  $region19: #{temperature_scaling_forward.1} parent=0 // pred_check_branch
    %1426 = sbr.rel (0) target = $region21
  $region20: #{temperature_scaling_forward.1} parent=0 // pred_region
    _
  $region21: #{temperature_scaling_forward.1} parent=0 // pred_fallthru
    _
  // Predicated region
  $region22: #{temperature_scaling_forward.1} parent=0 // pred_check
    _
  $region23: #{temperature_scaling_forward.1} parent=0 // pred_check_branch
    %1428 = sbr.rel (0) target = $region25
  $region24: #{temperature_scaling_forward.1} parent=0 // pred_region
    _
  $region25: #{temperature_scaling_forward.1} parent=0 // pred_fallthru
    _
  // Predicated region
  $region26: #{temperature_scaling_forward.1} parent=0 // pred_check
    _
  $region27: #{temperature_scaling_forward.1} parent=0 // pred_check_branch
    %1430 = sbr.rel (0) target = $region29
  $region28: #{temperature_scaling_forward.1} parent=0 // pred_region
    _
  $region29: #{temperature_scaling_forward.1} parent=0 // pred_fallthru
    _

</llo_original>
